<compile_context>
chip_gen: v7x
topology: tpu7x:2x2x1
jax: 0.10.0
libtpu: 0.0.40
codegen_flags: <defaults>
</compile_context>

<pallas_src>
import functools

import jax
import jax.numpy as jnp
from jax.experimental import pallas as pl
from jax.experimental.pallas import tpu as pltpu


def _multi_trip_loss_kernel(clas_ref, tgt_ref, feats_ref, out_ref, *,
                            lam, margin, eps, batch, tile_b):
    # clas_ref : (9, C, TB)    f32  -> 9 classification heads, batch on lanes
    # tgt_ref  : (9, TB)       i32  -> target class per (head, batch-col)
    # feats_ref: (3, 3, D, TB) f32  -> [anchor|positive|negative] x 3 stypes
    # out_ref  : (1, 8, 128)   f32  -> per-tile partial loss (lane-dense store)
    tile = pl.program_id(0)
    col = jax.lax.broadcasted_iota(jnp.int32, (1, tile_b), 1) + tile * tile_b
    valid = col < batch                                            # (1, TB)

    # ---- fused cross-entropy over all 9 (branch, stype) heads ----
    logits = clas_ref[...]                                         # (9, C, TB)
    m = jnp.max(logits, axis=1, keepdims=True)                     # (9, 1, TB)
    shifted = logits - m
    onehot = (jax.lax.broadcasted_iota(jnp.int32, logits.shape, 1)
              == tgt_ref[...][:, None, :])                         # (9, C, TB)
    # one elementwise pass over `shifted`: exp for LSE + masked select for target
    sum_exp = jnp.sum(jnp.exp(shifted), axis=1)                    # (9, TB)
    tgt_shift = jnp.sum(jnp.where(onehot, shifted, 0.0), axis=1)   # (9, TB)
    ce = jnp.log(sum_exp) - tgt_shift              # == lse - target_logit (m cancels)
    cla_part = jnp.sum(jnp.where(valid, ce, 0.0))

    # ---- fused triplet margin loss over all 3 stypes ----
    f = feats_ref[...]                                             # (3, 3, D, TB)
    a, p, n = f[0], f[1], f[2]                                     # (3, D, TB)
    d_ap = jnp.sqrt(jnp.sum((a - p + eps) ** 2, axis=1))           # (3, TB)
    d_an = jnp.sqrt(jnp.sum((a - n + eps) ** 2, axis=1))
    hinge = jnp.maximum(d_ap - d_an + margin, 0.0)
    trip_part = jnp.sum(jnp.where(valid, hinge, 0.0))

    part = cla_part * (1.0 / (9.0 * batch)) + (lam / batch) * trip_part
    out_ref[...] = jnp.broadcast_to(part, (1, 8, 128)).astype(jnp.float32)


def multi_trip_loss(feats, clas, labels, *, lam=10.0, margin=1.0, eps=1e-6,
                    tile_b=512):
    """feats: (3,3,B,D) f32, clas: (3,3,B,C) f32, labels: (B,) int in {0,1}."""
    nb, ns, B, D = feats.shape
    C = clas.shape[-1]
    assert (nb, ns) == (3, 3) and clas.shape[:3] == (3, 3, B)

    y = labels.astype(jnp.int32)  # labels must be binary: branch 2 targets 1-y

    # --- wrapper-side layout plumbing: batch axis last (lane-dense) ---
    clas_t = jnp.transpose(clas.reshape(9, B, C), (0, 2, 1)).astype(jnp.float32)  # (9, C, B)
    feats_t = jnp.transpose(feats, (0, 1, 3, 2)).astype(jnp.float32)              # (3, 3, D, B)
    tgt = jnp.broadcast_to(jnp.stack([y, y, 1 - y], axis=0)[:, None, :],
                           (3, 3, B)).reshape(9, B)                                # (9, B)

    # --- batch tiling: single tile for small B; 128-aligned tiles + padding ---
    if B <= tile_b:
        TB, B_pad = B, B
    else:
        TB = max(128, (tile_b // 128) * 128)
        B_pad = ((B + TB - 1) // TB) * TB
    if B_pad != B:
        pad = B_pad - B
        clas_t = jnp.pad(clas_t, ((0, 0), (0, 0), (0, pad)))
        tgt = jnp.pad(tgt, ((0, 0), (0, pad)))
        feats_t = jnp.pad(feats_t, ((0, 0), (0, 0), (0, 0), (0, pad)))
    num_tiles = B_pad // TB

    kernel = functools.partial(
        _multi_trip_loss_kernel,
        lam=float(lam), margin=float(margin), eps=float(eps),
        batch=int(B), tile_b=int(TB))

    # per-step input bytes (double-buffered by the pipeline) + generous headroom,
    # capped well below every generation's physical VMEM (v7x = 64 MiB).
    step_bytes = 4 * (9 * C * TB + 9 * TB + 9 * D * TB + 8 * 128)
    vmem_bytes = int(min(32 * 1024 * 1024, max(8 * 1024 * 1024, 6 * step_bytes)))

    partials = pl.pallas_call(
        kernel,
        out_shape=jax.ShapeDtypeStruct((num_tiles, 8, 128), jnp.float32),
        grid=(num_tiles,),
        in_specs=[
            pl.BlockSpec((9, C, TB), lambda i: (0, 0, i)),       # clas_t
            pl.BlockSpec((9, TB), lambda i: (0, i)),             # tgt
            pl.BlockSpec((3, 3, D, TB), lambda i: (0, 0, 0, i)),  # feats_t
        ],
        out_specs=pl.BlockSpec((1, 8, 128), lambda i: (i, 0, 0)),
        compiler_params=pltpu.CompilerParams(
            dimension_semantics=("parallel",),
            vmem_limit_bytes=vmem_bytes),
    )(clas_t, tgt, feats_t)

    return jnp.sum(partials[:, 0, 0])


def multi_trip_loss_ref(feats, clas, labels, *, lam=10.0, margin=1.0, eps=1e-6):
    """Pure-JAX reference mirroring the PyTorch module."""
    labels = labels.astype(jnp.int32)

    def ce(logits, y):
        logp = jax.nn.log_softmax(logits, axis=-1)
        return -jnp.mean(jnp.take_along_axis(logp, y[:, None], axis=-1))

    cla_loss = 0.0
    trip_loss = 0.0
    for s in range(3):
        cla_loss += ce(clas[0, s], labels) + ce(clas[1, s], labels) + ce(clas[2, s], 1 - labels)
        a, p, n = feats[0, s], feats[1, s], feats[2, s]
        d_ap = jnp.sqrt(jnp.sum((a - p + eps) ** 2, axis=-1))
        d_an = jnp.sqrt(jnp.sum((a - n + eps) ** 2, axis=-1))
        trip_loss += jnp.mean(jnp.maximum(d_ap - d_an + margin, 0.0))
    return cla_loss / 9.0 + lam * trip_loss


if __name__ == "__main__":
    D, C = 32, 8
    keys = jax.random.split(jax.random.PRNGKey(0), 6)

    # --- small demo shape: single tile, no padding ---
    B = 8
    feats = jax.random.normal(keys[0], (3, 3, B, D), dtype=jnp.float32)
    clas = jax.random.normal(keys[1], (3, 3, B, C), dtype=jnp.float32)
    labels = jax.random.randint(keys[2], (B,), 0, 2, dtype=jnp.int32)

    loss = multi_trip_loss(feats, clas, labels)
    jax.block_until_ready(loss)
    ref = multi_trip_loss_ref(feats, clas, labels)
    assert jnp.allclose(loss, ref, rtol=1e-4, atol=1e-4), (loss, ref)

    # --- multi-tile + padded-tail path (grid > 1, in-kernel masking) ---
    B2 = 300
    feats2 = jax.random.normal(keys[3], (3, 3, B2, D), dtype=jnp.float32)
    clas2 = jax.random.normal(keys[4], (3, 3, B2, C), dtype=jnp.float32)
    labels2 = jax.random.randint(keys[5], (B2,), 0, 2, dtype=jnp.int32)

    loss2 = multi_trip_loss(feats2, clas2, labels2, tile_b=128)
    jax.block_until_ready(loss2)
    ref2 = multi_trip_loss_ref(feats2, clas2, labels2)
    assert jnp.allclose(loss2, ref2, rtol=1e-4, atol=1e-4), (loss2, ref2)

    print("KERNEL_OK")
</pallas_src>

<mosaic_0001>
module attributes {stable_mosaic.version = 11 : i64} {
  func.func @_multi_trip_loss_kernel(%arg0: i32, %arg1: memref<9x8x8xf32, #tpu.memory_space<vmem>>, %arg2: memref<9x8xi32, #tpu.memory_space<vmem>>, %arg3: memref<3x3x32x8xf32, #tpu.memory_space<vmem>>, %arg4: memref<1x8x128xf32, #tpu.memory_space<vmem>>) attributes {dimension_semantics = [#tpu.dimension_semantics<parallel>], iteration_bounds = array<i64: 1>, scalar_prefetch = 0 : i64, scratch_operands = 0 : i64, tpu.core_type = #tpu.core_type<tc>, window_params = [{transform_indices = @transform_0, window_bounds = array<i64: 9, 8, 8>}, {transform_indices = @transform_1, window_bounds = array<i64: 9, 8>}, {transform_indices = @transform_2, window_bounds = array<i64: 3, 3, 32, 8>}, {transform_indices = @transform_3, window_bounds = array<i64: 1, 8, 128>}]} {
    %0 = tpu.iota {dimensions = array<i32: 1>} : vector<1x8xi32>
    %c8_i32 = arith.constant 8 : i32
    %1 = arith.muli %arg0, %c8_i32 : i32
    %2 = vector.broadcast %1 : i32 to vector<1x8xi32>
    %3 = arith.addi %0, %2 : vector<1x8xi32>
    %c8_i32_0 = arith.constant 8 : i32
    %4 = vector.broadcast %c8_i32_0 : i32 to vector<1x8xi32>
    %5 = arith.cmpi slt, %3, %4 : vector<1x8xi32>
    %c0 = arith.constant 0 : index
    %c0_1 = arith.constant 0 : index
    %c0_2 = arith.constant 0 : index
    %6 = vector.load %arg1[%c0, %c0_1, %c0_2] : memref<9x8x8xf32, #tpu.memory_space<vmem>>, vector<9x8x8xf32>
    %cst = arith.constant dense<0xFF800000> : vector<9x8xf32>
    %7 = vector.multi_reduction <maximumf>, %6, %cst [1] : vector<9x8x8xf32> to vector<9x8xf32>
    %8 = vector.shape_cast %7 : vector<9x8xf32> to vector<9x1x8xf32>
    %9 = vector.broadcast %8 : vector<9x1x8xf32> to vector<9x8x8xf32>
    %10 = arith.subf %6, %9 : vector<9x8x8xf32>
    %11 = tpu.iota {dimensions = array<i32: 1>} : vector<9x8x8xi32>
    %c0_3 = arith.constant 0 : index
    %c0_4 = arith.constant 0 : index
    %12 = vector.load %arg2[%c0_3, %c0_4] : memref<9x8xi32, #tpu.memory_space<vmem>>, vector<9x8xi32>
    %13 = vector.shape_cast %12 : vector<9x8xi32> to vector<9x1x8xi32>
    %14 = vector.broadcast %13 : vector<9x1x8xi32> to vector<9x8x8xi32>
    %15 = arith.cmpi eq, %11, %14 : vector<9x8x8xi32>
    %16 = math.exp %10 : vector<9x8x8xf32>
    %cst_5 = arith.constant dense<0.000000e+00> : vector<9x8xf32>
    %17 = vector.multi_reduction <add>, %16, %cst_5 [1] : vector<9x8x8xf32> to vector<9x8xf32>
    %cst_6 = arith.constant 0.000000e+00 : f32
    %18 = vector.broadcast %cst_6 : f32 to vector<9x8x8xf32>
    %19 = arith.select %15, %10, %18 : vector<9x8x8xi1>, vector<9x8x8xf32>
    %cst_7 = arith.constant dense<0.000000e+00> : vector<9x8xf32>
    %20 = vector.multi_reduction <add>, %19, %cst_7 [1] : vector<9x8x8xf32> to vector<9x8xf32>
    %21 = math.log %17 : vector<9x8xf32>
    %22 = arith.subf %21, %20 : vector<9x8xf32>
    %cst_8 = arith.constant 0.000000e+00 : f32
    %23 = vector.shape_cast %5 : vector<1x8xi1> to vector<1x8xi1>
    %24 = vector.broadcast %23 : vector<1x8xi1> to vector<9x8xi1>
    %25 = vector.broadcast %cst_8 : f32 to vector<9x8xf32>
    %26 = arith.select %24, %22, %25 : vector<9x8xi1>, vector<9x8xf32>
    %27 = vector.shape_cast %26 : vector<9x8xf32> to vector<1x9x8xf32>
    %cst_9 = arith.constant dense<0.000000e+00> : vector<1xf32>
    %28 = vector.multi_reduction <add>, %27, %cst_9 [1, 2] : vector<1x9x8xf32> to vector<1xf32>
    %29 = vector.shape_cast %28 : vector<1xf32> to vector<1x1x1xf32>
    %30 = vector.extract %29[0, 0, 0] : f32 from vector<1x1x1xf32>
    %c0_10 = arith.constant 0 : index
    %c0_11 = arith.constant 0 : index
    %c0_12 = arith.constant 0 : index
    %c0_13 = arith.constant 0 : index
    %31 = vector.load %arg3[%c0_10, %c0_11, %c0_12, %c0_13] : memref<3x3x32x8xf32, #tpu.memory_space<vmem>>, vector<3x3x32x8xf32>
    %32 = vector.extract_strided_slice %31 {offsets = [0, 0, 0, 0], sizes = [1, 3, 32, 8], strides = [1, 1, 1, 1]} : vector<3x3x32x8xf32> to vector<1x3x32x8xf32>
    %33 = vector.shape_cast %32 : vector<1x3x32x8xf32> to vector<3x32x8xf32>
    %34 = vector.extract_strided_slice %31 {offsets = [1, 0, 0, 0], sizes = [1, 3, 32, 8], strides = [1, 1, 1, 1]} : vector<3x3x32x8xf32> to vector<1x3x32x8xf32>
    %35 = vector.shape_cast %34 : vector<1x3x32x8xf32> to vector<3x32x8xf32>
    %36 = vector.extract_strided_slice %31 {offsets = [2, 0, 0, 0], sizes = [1, 3, 32, 8], strides = [1, 1, 1, 1]} : vector<3x3x32x8xf32> to vector<1x3x32x8xf32>
    %37 = vector.shape_cast %36 : vector<1x3x32x8xf32> to vector<3x32x8xf32>
    %38 = arith.subf %33, %35 : vector<3x32x8xf32>
    %cst_14 = arith.constant 9.99999997E-7 : f32
    %39 = vector.broadcast %cst_14 : f32 to vector<3x32x8xf32>
    %40 = arith.addf %38, %39 : vector<3x32x8xf32>
    %41 = arith.mulf %40, %40 : vector<3x32x8xf32>
    %cst_15 = arith.constant dense<0.000000e+00> : vector<3x8xf32>
    %42 = vector.multi_reduction <add>, %41, %cst_15 [1] : vector<3x32x8xf32> to vector<3x8xf32>
    %43 = math.sqrt %42 : vector<3x8xf32>
    %44 = arith.subf %33, %37 : vector<3x32x8xf32>
    %cst_16 = arith.constant 9.99999997E-7 : f32
    %45 = vector.broadcast %cst_16 : f32 to vector<3x32x8xf32>
    %46 = arith.addf %44, %45 : vector<3x32x8xf32>
    %47 = arith.mulf %46, %46 : vector<3x32x8xf32>
    %cst_17 = arith.constant dense<0.000000e+00> : vector<3x8xf32>
    %48 = vector.multi_reduction <add>, %47, %cst_17 [1] : vector<3x32x8xf32> to vector<3x8xf32>
    %49 = math.sqrt %48 : vector<3x8xf32>
    %50 = arith.subf %43, %49 : vector<3x8xf32>
    %cst_18 = arith.constant 1.000000e+00 : f32
    %51 = vector.broadcast %cst_18 : f32 to vector<3x8xf32>
    %52 = arith.addf %50, %51 : vector<3x8xf32>
    %cst_19 = arith.constant 0.000000e+00 : f32
    %53 = vector.broadcast %cst_19 : f32 to vector<3x8xf32>
    %54 = arith.maximumf %52, %53 : vector<3x8xf32>
    %cst_20 = arith.constant 0.000000e+00 : f32
    %55 = vector.shape_cast %5 : vector<1x8xi1> to vector<1x8xi1>
    %56 = vector.broadcast %55 : vector<1x8xi1> to vector<3x8xi1>
    %57 = vector.broadcast %cst_20 : f32 to vector<3x8xf32>
    %58 = arith.select %56, %54, %57 : vector<3x8xi1>, vector<3x8xf32>
    %59 = vector.shape_cast %58 : vector<3x8xf32> to vector<1x3x8xf32>
    %cst_21 = arith.constant dense<0.000000e+00> : vector<1xf32>
    %60 = vector.multi_reduction <add>, %59, %cst_21 [1, 2] : vector<1x3x8xf32> to vector<1xf32>
    %61 = vector.shape_cast %60 : vector<1xf32> to vector<1x1x1xf32>
    %62 = vector.extract %61[0, 0, 0] : f32 from vector<1x1x1xf32>
    %cst_22 = arith.constant 0.013888889 : f32
    %63 = arith.mulf %30, %cst_22 : f32
    %cst_23 = arith.constant 1.250000e+00 : f32
    %64 = arith.mulf %cst_23, %62 : f32
    %65 = arith.addf %63, %64 : f32
    %66 = vector.broadcast %65 : f32 to vector<1x8x128xf32>
    %c0_24 = arith.constant 0 : index
    %c0_25 = arith.constant 0 : index
    %c0_26 = arith.constant 0 : index
    %67 = vector.load %arg4[%c0_24, %c0_25, %c0_26] : memref<1x8x128xf32, #tpu.memory_space<vmem>>, vector<1x8x128xf32>
    tpu.vector_store %arg4[%c0_24, %c0_25, %c0_26], %66 {strides = array<i32>} : memref<1x8x128xf32, #tpu.memory_space<vmem>>, vector<1x8x128xf32>,
    return
  }
  func.func @transform_0(%arg0: i32) -> (i32, i32, i32) {
    %c0_i32 = arith.constant 0 : i32
    %c0_i32_0 = arith.constant 0 : i32
    %c0_i32_1 = arith.constant 0 : i32
    return %c0_i32, %c0_i32_0, %arg0 : i32, i32, i32
  }
  func.func @transform_1(%arg0: i32) -> (i32, i32) {
    %c0_i32 = arith.constant 0 : i32
    %c0_i32_0 = arith.constant 0 : i32
    return %c0_i32, %arg0 : i32, i32
  }
  func.func @transform_2(%arg0: i32) -> (i32, i32, i32, i32) {
    %c0_i32 = arith.constant 0 : i32
    %c0_i32_0 = arith.constant 0 : i32
    %c0_i32_1 = arith.constant 0 : i32
    %c0_i32_2 = arith.constant 0 : i32
    return %c0_i32, %c0_i32_0, %c0_i32_1, %arg0 : i32, i32, i32, i32
  }
  func.func @transform_3(%arg0: i32) -> (i32, i32, i32) {
    %c0_i32 = arith.constant 0 : i32
    %c0_i32_0 = arith.constant 0 : i32
    %c0_i32_1 = arith.constant 0 : i32
    return %arg0, %c0_i32, %c0_i32_0 : i32, i32, i32
  }
}

</mosaic_0001>

<llo_original>
// kernel: tpu_custom_call.1
$region0: #{tpu_custom_call.1}
  #allocation0 [shape = 'u32[]', space=smem, size = 0x4, offset = 0x4, fixed_abs, tag = 'smem constant byte address 0x4 - core index']
  #allocation1 [shape = 'u32[144,128]{1,0:T(1,128)}', space=vmem, size = 0x12000, scoped, tag = 'internal scratch']
  %s0 = inlined_call_operand.vmem [shape: f32[9,8,8], index: 0, kind: input, shape index: {}]
  %s1 = inlined_call_operand.vmem [shape: s32[9,8], index: 1, kind: input, shape index: {}]
  %s2 = inlined_call_operand.vmem [shape: f32[3,3,32,8], index: 2, kind: input, shape index: {}]
  %s3 = inlined_call_operand.hbm [shape: f32[1,8,128], index: 3, kind: output, shape index: {}]
  %s4 = sld [smem:[#allocation0]]
  $region22: #{tpu_custom_call.1} parent=0
    _
  %s6 = ssub.s32 1, %s4
  %s7 = scalar_select 0, %s6, %s4
  $region1: #{tpu_custom_call.1} parent=0
    #allocation2 [shape = 'u8[4096]{0}', space=vmem, size = 0x1000, scoped, tag = 'output window, operand 0, single buffered']
    #allocation3 [shape = 's32[1]{0}', space=sflag, size = 0x4, scoped, tag = 'scoped memory for tpu_custom_call.1']
    %8 = vsyncpa [#allocation3], 0
    // Predicated region
    $region2: #{tpu_custom_call.1} parent=1 // pred_check
      _
    $region3: #{tpu_custom_call.1} parent=1 // pred_check_branch
      %10 = sbr.rel (0) target = $region5
    $region4: #{tpu_custom_call.1} parent=1 // pred_region
      _
    $region5: #{tpu_custom_call.1} parent=1 // pred_fallthru
      _
    // Predicated region
    $region6: #{tpu_custom_call.1} parent=1 // pred_check
      _
    $region7: #{tpu_custom_call.1} parent=1 // pred_check_branch
      %12 = sbr.rel (0) target = $region9
    $region8: #{tpu_custom_call.1} parent=1 // pred_region
      _
    $region9: #{tpu_custom_call.1} parent=1 // pred_fallthru
      _
    // Predicated region
    $region10: #{tpu_custom_call.1} parent=1 // pred_check
      _
    $region11: #{tpu_custom_call.1} parent=1 // pred_check_branch
      %14 = sbr.rel (0) target = $region13
    $region12: #{tpu_custom_call.1} parent=1 // pred_region
      _
    $region13: #{tpu_custom_call.1} parent=1 // pred_fallthru
      _
    %v15 = vlaneseq
    %v16 = vand.u32 %v15, 127
    %s17 = smul.u32 0, 8
    %v18 = vstv %s17
    %v19 = vadd.s32 %v16, %v18
    %vm20 = vcmp.lt.s32.totalorder %v19, 8
    %v21 = vld [vmem:[%s0] sm:$0xff]
    %v22 = vld [vmem:[%s0 + $0x8] sm:$0xff]
    %v23 = vld [vmem:[%s0 + $0x10] sm:$0xff]
    %v24 = vld [vmem:[%s0 + $0x18] sm:$0xff]
    %v25 = vld [vmem:[%s0 + $0x20] sm:$0xff]
    %v26 = vld [vmem:[%s0 + $0x28] sm:$0xff]
    %v27 = vld [vmem:[%s0 + $0x30] sm:$0xff]
    %v28 = vld [vmem:[%s0 + $0x38] sm:$0xff]
    %v29 = vld [vmem:[%s0 + $0x40] sm:$0xff]
    %vm30 = vcmask 64512
    %v31 = vsel %vm30, %v21, -inf
    %v32 = vrot.slane %v31, 4
    %v33 = vmax.f32 %v31, %v32
    %v34 = vrot.slane %v33, 2
    %v35 = vmax.f32 %v33, %v34
    %v36 = vrot.slane %v35, 1
    %v37 = vmax.f32 %v35, %v36
    %v38 = vsel %vm30, %v22, -inf
    %v39 = vrot.slane %v38, 4
    %v40 = vmax.f32 %v38, %v39
    %v41 = vrot.slane %v40, 2
    %v42 = vmax.f32 %v40, %v41
    %v43 = vrot.slane %v42, 1
    %v44 = vmax.f32 %v42, %v43
    %v45 = vsel %vm30, %v23, -inf
    %v46 = vrot.slane %v45, 4
    %v47 = vmax.f32 %v45, %v46
    %v48 = vrot.slane %v47, 2
    %v49 = vmax.f32 %v47, %v48
    %v50 = vrot.slane %v49, 1
    %v51 = vmax.f32 %v49, %v50
    %v52 = vsel %vm30, %v24, -inf
    %v53 = vrot.slane %v52, 4
    %v54 = vmax.f32 %v52, %v53
    %v55 = vrot.slane %v54, 2
    %v56 = vmax.f32 %v54, %v55
    %v57 = vrot.slane %v56, 1
    %v58 = vmax.f32 %v56, %v57
    %v59 = vsel %vm30, %v25, -inf
    %v60 = vrot.slane %v59, 4
    %v61 = vmax.f32 %v59, %v60
    %v62 = vrot.slane %v61, 2
    %v63 = vmax.f32 %v61, %v62
    %v64 = vrot.slane %v63, 1
    %v65 = vmax.f32 %v63, %v64
    %v66 = vsel %vm30, %v26, -inf
    %v67 = vrot.slane %v66, 4
    %v68 = vmax.f32 %v66, %v67
    %v69 = vrot.slane %v68, 2
    %v70 = vmax.f32 %v68, %v69
    %v71 = vrot.slane %v70, 1
    %v72 = vmax.f32 %v70, %v71
    %v73 = vsel %vm30, %v27, -inf
    %v74 = vrot.slane %v73, 4
    %v75 = vmax.f32 %v73, %v74
    %v76 = vrot.slane %v75, 2
    %v77 = vmax.f32 %v75, %v76
    %v78 = vrot.slane %v77, 1
    %v79 = vmax.f32 %v77, %v78
    %v80 = vsel %vm30, %v28, -inf
    %v81 = vrot.slane %v80, 4
    %v82 = vmax.f32 %v80, %v81
    %v83 = vrot.slane %v82, 2
    %v84 = vmax.f32 %v82, %v83
    %v85 = vrot.slane %v84, 1
    %v86 = vmax.f32 %v84, %v85
    %v87 = vsel %vm30, %v29, -inf
    %v88 = vrot.slane %v87, 4
    %v89 = vmax.f32 %v87, %v88
    %v90 = vrot.slane %v89, 2
    %v91 = vmax.f32 %v89, %v90
    %v92 = vrot.slane %v91, 1
    %v93 = vmax.f32 %v91, %v92
    %v94 = vsub.f32 %v21, %v37
    %v95 = vsub.f32 %v22, %v44
    %v96 = vsub.f32 %v23, %v51
    %v97 = vsub.f32 %v24, %v58
    %v98 = vsub.f32 %v25, %v65
    %v99 = vsub.f32 %v26, %v72
    %v100 = vsub.f32 %v27, %v79
    %v101 = vsub.f32 %v28, %v86
    %v102 = vsub.f32 %v29, %v93
    %v103 = vlaneseq
    %v104 = vshrl.u32 %v103, 7
    %v105 = vld [vmem:[%s1] sm:$0xff]
    %v106 = vld [vmem:[%s1 + $0x8] sm:$0x1]
    %v107 = vcombine.high %v105, %v105
    %v109 = vunpack.c.l.s4 1966171168
    %v110 = vunpack.c.0.s8 %v109
    %v111 = vlaneseq
    %v112 = vshrl.u32 %v111, 7
    %v113 = vsub.s32 %v110, %v112
    %v114 = vrot.slane %v105, %v113
    %v116 = vunpack.c.l.s4 1966171168
    %v117 = vunpack.c.0.s8 %v116
    %v118 = vlaneseq
    %v119 = vshrl.u32 %v118, 7
    %v120 = vsub.s32 %v117, %v119
    %v121 = vrot.slane %v107, %v120
    %v122 = vcombine.high %v114, %v114
    %v123 = vcombine.high %v121, %v121
    %v125 = vunpack.c.l.s4 1966171168
    %v126 = vunpack.c.0.s8 %v125
    %v127 = vlaneseq
    %v128 = vshrl.u32 %v127, 7
    %v129 = vsub.s32 %v126, %v128
    %v130 = vrot.slane %v114, %v129
    %v132 = vunpack.c.l.s4 1966171168
    %v133 = vunpack.c.0.s8 %v132
    %v134 = vlaneseq
    %v135 = vshrl.u32 %v134, 7
    %v136 = vsub.s32 %v133, %v135
    %v137 = vrot.slane %v121, %v136
    %v139 = vunpack.c.l.s4 1966171168
    %v140 = vunpack.c.0.s8 %v139
    %v141 = vlaneseq
    %v142 = vshrl.u32 %v141, 7
    %v143 = vsub.s32 %v140, %v142
    %v144 = vrot.slane %v122, %v143
    %v146 = vunpack.c.l.s4 1966171168
    %v147 = vunpack.c.0.s8 %v146
    %v148 = vlaneseq
    %v149 = vshrl.u32 %v148, 7
    %v150 = vsub.s32 %v147, %v149
    %v151 = vrot.slane %v123, %v150
    %v152 = vcombine.high %v130, %v130
    %v153 = vcombine.high %v137, %v137
    %v154 = vcombine.high %v144, %v144
    %v155 = vcombine.high %v151, %v151
    %v157 = vunpack.c.l.s4 1966171168
    %v158 = vunpack.c.0.s8 %v157
    %v159 = vlaneseq
    %v160 = vshrl.u32 %v159, 7
    %v161 = vsub.s32 %v158, %v160
    %v162 = vrot.slane %v106, %v161
    %v164 = vunpack.c.l.s4 1966171168
    %v165 = vunpack.c.0.s8 %v164
    %v166 = vlaneseq
    %v167 = vshrl.u32 %v166, 7
    %v168 = vsub.s32 %v165, %v167
    %v169 = vrot.slane %v162, %v168
    %v170 = vlaneseq
    %v171 = vshrl.u32 %v170, 7
    %v172 = vsub.s32 0, %v171
    %v173 = vrot.slane %v130, %v172
    %v174 = vlaneseq
    %v175 = vshrl.u32 %v174, 7
    %v176 = vsub.s32 0, %v175
    %v177 = vrot.slane %v144, %v176
    %v178 = vlaneseq
    %v179 = vshrl.u32 %v178, 7
    %v180 = vsub.s32 0, %v179
    %v181 = vrot.slane %v152, %v180
    %v182 = vlaneseq
    %v183 = vshrl.u32 %v182, 7
    %v184 = vsub.s32 0, %v183
    %v185 = vrot.slane %v154, %v184
    %v186 = vlaneseq
    %v187 = vshrl.u32 %v186, 7
    %v188 = vsub.s32 0, %v187
    %v189 = vrot.slane %v137, %v188
    %v190 = vlaneseq
    %v191 = vshrl.u32 %v190, 7
    %v192 = vsub.s32 0, %v191
    %v193 = vrot.slane %v151, %v192
    %v194 = vlaneseq
    %v195 = vshrl.u32 %v194, 7
    %v196 = vsub.s32 0, %v195
    %v197 = vrot.slane %v153, %v196
    %v198 = vlaneseq
    %v199 = vshrl.u32 %v198, 7
    %v200 = vsub.s32 0, %v199
    %v201 = vrot.slane %v155, %v200
    %v202 = vlaneseq
    %v203 = vshrl.u32 %v202, 7
    %v204 = vsub.s32 0, %v203
    %v205 = vrot.slane %v169, %v204
    %vm206 = vcmp.eq.s32.totalorder %v104, %v173
    %vm207 = vcmp.eq.s32.totalorder %v104, %v177
    %vm208 = vcmp.eq.s32.totalorder %v104, %v181
    %vm209 = vcmp.eq.s32.totalorder %v104, %v185
    %vm210 = vcmp.eq.s32.totalorder %v104, %v189
    %vm211 = vcmp.eq.s32.totalorder %v104, %v193
    %vm212 = vcmp.eq.s32.totalorder %v104, %v197
    %vm213 = vcmp.eq.s32.totalorder %v104, %v201
    %vm214 = vcmp.eq.s32.totalorder %v104, %v205
    %v215 = vmul.f32 %v94, 1.442695
    %v216 = vpow.pop %v215
    %v217 = vmul.f32 %v95, 1.442695
    %v218 = vpow.pop %v217
    %v219 = vmul.f32 %v96, 1.442695
    %v220 = vpow.pop %v219
    %v221 = vmul.f32 %v97, 1.442695
    %v222 = vpow.pop %v221
    %v223 = vmul.f32 %v98, 1.442695
    %v224 = vpow.pop %v223
    %v225 = vmul.f32 %v99, 1.442695
    %v226 = vpow.pop %v225
    %v227 = vmul.f32 %v100, 1.442695
    %v228 = vpow.pop %v227
    %v229 = vmul.f32 %v101, 1.442695
    %v230 = vpow.pop %v229
    %v231 = vmul.f32 %v102, 1.442695
    %v232 = vpow.pop %v231
    %v233 = vsel %vm30, %v216, 0.0
    %v234 = vrot.slane %v233, 4
    %v235 = vadd.f32 %v233, %v234
    %v236 = vrot.slane %v235, 2
    %v237 = vadd.f32 %v235, %v236
    %v238 = vrot.slane %v237, 1
    %v239 = vadd.f32 %v237, %v238
    %v240 = vsel %vm30, %v218, 0.0
    %v241 = vrot.slane %v240, 4
    %v242 = vadd.f32 %v240, %v241
    %v243 = vrot.slane %v242, 2
    %v244 = vadd.f32 %v242, %v243
    %v245 = vrot.slane %v244, 1
    %v246 = vadd.f32 %v244, %v245
    %v247 = vsel %vm30, %v220, 0.0
    %v248 = vrot.slane %v247, 4
    %v249 = vadd.f32 %v247, %v248
    %v250 = vrot.slane %v249, 2
    %v251 = vadd.f32 %v249, %v250
    %v252 = vrot.slane %v251, 1
    %v253 = vadd.f32 %v251, %v252
    %v254 = vsel %vm30, %v222, 0.0
    %v255 = vrot.slane %v254, 4
    %v256 = vadd.f32 %v254, %v255
    %v257 = vrot.slane %v256, 2
    %v258 = vadd.f32 %v256, %v257
    %v259 = vrot.slane %v258, 1
    %v260 = vadd.f32 %v258, %v259
    %v261 = vsel %vm30, %v224, 0.0
    %v262 = vrot.slane %v261, 4
    %v263 = vadd.f32 %v261, %v262
    %v264 = vrot.slane %v263, 2
    %v265 = vadd.f32 %v263, %v264
    %v266 = vrot.slane %v265, 1
    %v267 = vadd.f32 %v265, %v266
    %v268 = vsel %vm30, %v226, 0.0
    %v269 = vrot.slane %v268, 4
    %v270 = vadd.f32 %v268, %v269
    %v271 = vrot.slane %v270, 2
    %v272 = vadd.f32 %v270, %v271
    %v273 = vrot.slane %v272, 1
    %v274 = vadd.f32 %v272, %v273
    %v275 = vsel %vm30, %v228, 0.0
    %v276 = vrot.slane %v275, 4
    %v277 = vadd.f32 %v275, %v276
    %v278 = vrot.slane %v277, 2
    %v279 = vadd.f32 %v277, %v278
    %v280 = vrot.slane %v279, 1
    %v281 = vadd.f32 %v279, %v280
    %v282 = vsel %vm30, %v230, 0.0
    %v283 = vrot.slane %v282, 4
    %v284 = vadd.f32 %v282, %v283
    %v285 = vrot.slane %v284, 2
    %v286 = vadd.f32 %v284, %v285
    %v287 = vrot.slane %v286, 1
    %v288 = vadd.f32 %v286, %v287
    %v289 = vsel %vm30, %v232, 0.0
    %v290 = vrot.slane %v289, 4
    %v291 = vadd.f32 %v289, %v290
    %v292 = vrot.slane %v291, 2
    %v293 = vadd.f32 %v291, %v292
    %v294 = vrot.slane %v293, 1
    %v295 = vadd.f32 %v293, %v294
    %v296 = vsel %vm206, %v94, 0.0
    %v297 = vsel %vm207, %v95, 0.0
    %v298 = vsel %vm208, %v96, 0.0
    %v299 = vsel %vm209, %v97, 0.0
    %v300 = vsel %vm210, %v98, 0.0
    %v301 = vsel %vm211, %v99, 0.0
    %v302 = vsel %vm212, %v100, 0.0
    %v303 = vsel %vm213, %v101, 0.0
    %v304 = vsel %vm214, %v102, 0.0
    %v305 = vsel %vm30, %v296, 0.0
    %v306 = vrot.slane %v305, 4
    %v307 = vadd.f32 %v305, %v306
    %v308 = vrot.slane %v307, 2
    %v309 = vadd.f32 %v307, %v308
    %v310 = vrot.slane %v309, 1
    %v311 = vadd.f32 %v309, %v310
    %v312 = vsel %vm30, %v297, 0.0
    %v313 = vrot.slane %v312, 4
    %v314 = vadd.f32 %v312, %v313
    %v315 = vrot.slane %v314, 2
    %v316 = vadd.f32 %v314, %v315
    %v317 = vrot.slane %v316, 1
    %v318 = vadd.f32 %v316, %v317
    %v319 = vsel %vm30, %v298, 0.0
    %v320 = vrot.slane %v319, 4
    %v321 = vadd.f32 %v319, %v320
    %v322 = vrot.slane %v321, 2
    %v323 = vadd.f32 %v321, %v322
    %v324 = vrot.slane %v323, 1
    %v325 = vadd.f32 %v323, %v324
    %v326 = vsel %vm30, %v299, 0.0
    %v327 = vrot.slane %v326, 4
    %v328 = vadd.f32 %v326, %v327
    %v329 = vrot.slane %v328, 2
    %v330 = vadd.f32 %v328, %v329
    %v331 = vrot.slane %v330, 1
    %v332 = vadd.f32 %v330, %v331
    %v333 = vsel %vm30, %v300, 0.0
    %v334 = vrot.slane %v333, 4
    %v335 = vadd.f32 %v333, %v334
    %v336 = vrot.slane %v335, 2
    %v337 = vadd.f32 %v335, %v336
    %v338 = vrot.slane %v337, 1
    %v339 = vadd.f32 %v337, %v338
    %v340 = vsel %vm30, %v301, 0.0
    %v341 = vrot.slane %v340, 4
    %v342 = vadd.f32 %v340, %v341
    %v343 = vrot.slane %v342, 2
    %v344 = vadd.f32 %v342, %v343
    %v345 = vrot.slane %v344, 1
    %v346 = vadd.f32 %v344, %v345
    %v347 = vsel %vm30, %v302, 0.0
    %v348 = vrot.slane %v347, 4
    %v349 = vadd.f32 %v347, %v348
    %v350 = vrot.slane %v349, 2
    %v351 = vadd.f32 %v349, %v350
    %v352 = vrot.slane %v351, 1
    %v353 = vadd.f32 %v351, %v352
    %v354 = vsel %vm30, %v303, 0.0
    %v355 = vrot.slane %v354, 4
    %v356 = vadd.f32 %v354, %v355
    %v357 = vrot.slane %v356, 2
    %v358 = vadd.f32 %v356, %v357
    %v359 = vrot.slane %v358, 1
    %v360 = vadd.f32 %v358, %v359
    %v361 = vsel %vm30, %v304, 0.0
    %v362 = vrot.slane %v361, 4
    %v363 = vadd.f32 %v361, %v362
    %v364 = vrot.slane %v363, 2
    %v365 = vadd.f32 %v363, %v364
    %v366 = vrot.slane %v365, 1
    %v367 = vadd.f32 %v365, %v366
    %v368 = vlog2.pop %v239
    %v369 = vmul.f32 %v368, 0.6931472
    %v370 = vlog2.pop %v246
    %v371 = vmul.f32 %v370, 0.6931472
    %v372 = vlog2.pop %v253
    %v373 = vmul.f32 %v372, 0.6931472
    %v374 = vlog2.pop %v260
    %v375 = vmul.f32 %v374, 0.6931472
    %v376 = vlog2.pop %v267
    %v377 = vmul.f32 %v376, 0.6931472
    %v378 = vlog2.pop %v274
    %v379 = vmul.f32 %v378, 0.6931472
    %v380 = vlog2.pop %v281
    %v381 = vmul.f32 %v380, 0.6931472
    %v382 = vlog2.pop %v288
    %v383 = vmul.f32 %v382, 0.6931472
    %v384 = vlog2.pop %v295
    %v385 = vmul.f32 %v384, 0.6931472
    %v386 = vsub.f32 %v369, %v311
    %v387 = vsub.f32 %v371, %v318
    %v388 = vsub.f32 %v373, %v325
    %v389 = vsub.f32 %v375, %v332
    %v390 = vsub.f32 %v377, %v339
    %v391 = vsub.f32 %v379, %v346
    %v392 = vsub.f32 %v381, %v353
    %v393 = vsub.f32 %v383, %v360
    %v394 = vsub.f32 %v385, %v367
    %v395 = vsel %vm20, 1, 0
    %vm396 = vcmp.eq.s32.totalorder %v395, 1
    %vm406 = vcmask 1041409
    %v407 = vsel %vm406, %v387, %v386
    %vm408 = vcmask 1042434
    %v409 = vsel %vm408, %v388, %v407
    %vm410 = vcmask 1043459
    %v411 = vsel %vm410, %v389, %v409
    %vm412 = vcmask 1044484
    %v413 = vsel %vm412, %v390, %v411
    %vm414 = vcmask 1045509
    %v415 = vsel %vm414, %v391, %v413
    %vm416 = vcmask 1046534
    %v417 = vsel %vm416, %v392, %v415
    %vm418 = vcmask 1047559
    %v419 = vsel %vm418, %v393, %v417
    %v422 = vsel %vm396, %v419, 0.0
    %v423 = vsel %vm396, %v394, 0.0
    %v424 = vsel %vm30, %v422, 0.0
    %vm425 = vcmask 57344
    %v426 = vsel %vm425, %v423, 0.0
    %v427 = vadd.f32 %v424, %v426
    %428 = vadd.xlane.f32.xlu0 %v427
    %v429 = vpop.xlane.xlu0 %428
    %v430 = vrot.slane %v429, 4
    %v431 = vadd.f32 %v429, %v430
    %v432 = vrot.slane %v431, 2
    %v433 = vadd.f32 %v431, %v432
    %v434 = vrot.slane %v433, 1
    %v435 = vadd.f32 %v433, %v434
    %s436 = vtos %v435
    %v437 = vld [vmem:[%s2] sm:$0xff]
    %v438 = vld [vmem:[%s2 + $0x8] sm:$0xff]
    %v439 = vld [vmem:[%s2 + $0x10] sm:$0xff]
    %v440 = vld [vmem:[%s2 + $0x18] sm:$0xff]
    %v441 = vld [vmem:[%s2 + $0x20] sm:$0xff]
    %v442 = vld [vmem:[%s2 + $0x28] sm:$0xff]
    %v443 = vld [vmem:[%s2 + $0x30] sm:$0xff]
    %v444 = vld [vmem:[%s2 + $0x38] sm:$0xff]
    %v445 = vld [vmem:[%s2 + $0x40] sm:$0xff]
    %v446 = vld [vmem:[%s2 + $0x48] sm:$0xff]
    %v447 = vld [vmem:[%s2 + $0x50] sm:$0xff]
    %v448 = vld [vmem:[%s2 + $0x58] sm:$0xff]
    %v449 = vld [vmem:[%s2 + $0x60] sm:$0xff]
    %v450 = vld [vmem:[%s2 + $0x68] sm:$0xff]
    %v451 = vld [vmem:[%s2 + $0x70] sm:$0xff]
    %v452 = vld [vmem:[%s2 + $0x78] sm:$0xff]
    %v453 = vld [vmem:[%s2 + $0x80] sm:$0xff]
    %v454 = vld [vmem:[%s2 + $0x88] sm:$0xff]
    %v455 = vld [vmem:[%s2 + $0x90] sm:$0xff]
    %v456 = vld [vmem:[%s2 + $0x98] sm:$0xff]
    %v457 = vld [vmem:[%s2 + $0xa0] sm:$0xff]
    %v458 = vld [vmem:[%s2 + $0xa8] sm:$0xff]
    %v459 = vld [vmem:[%s2 + $0xb0] sm:$0xff]
    %v460 = vld [vmem:[%s2 + $0xb8] sm:$0xff]
    %v461 = vld [vmem:[%s2 + $0xc0] sm:$0xff]
    %v462 = vld [vmem:[%s2 + $0xc8] sm:$0xff]
    %v463 = vld [vmem:[%s2 + $0xd0] sm:$0xff]
    %v464 = vld [vmem:[%s2 + $0xd8] sm:$0xff]
    %v465 = vld [vmem:[%s2 + $0xe0] sm:$0xff]
    %v466 = vld [vmem:[%s2 + $0xe8] sm:$0xff]
    %v467 = vld [vmem:[%s2 + $0xf0] sm:$0xff]
    %v468 = vld [vmem:[%s2 + $0xf8] sm:$0xff]
    %v469 = vld [vmem:[%s2 + $0x100] sm:$0xff]
    %v470 = vld [vmem:[%s2 + $0x108] sm:$0xff]
    %v471 = vld [vmem:[%s2 + $0x110] sm:$0xff]
    %v472 = vld [vmem:[%s2 + $0x118] sm:$0xff]
    %v473 = vsub.f32 %v437, %v449
    %v474 = vsub.f32 %v438, %v450
    %v475 = vsub.f32 %v439, %v451
    %v476 = vsub.f32 %v440, %v452
    %v477 = vsub.f32 %v441, %v453
    %v478 = vsub.f32 %v442, %v454
    %v479 = vsub.f32 %v443, %v455
    %v480 = vsub.f32 %v444, %v456
    %v481 = vsub.f32 %v445, %v457
    %v482 = vsub.f32 %v446, %v458
    %v483 = vsub.f32 %v447, %v459
    %v484 = vsub.f32 %v448, %v460
    %v485 = vadd.f32 %v473, 1e-06
    %v486 = vadd.f32 %v474, 1e-06
    %v487 = vadd.f32 %v475, 1e-06
    %v488 = vadd.f32 %v476, 1e-06
    %v489 = vadd.f32 %v477, 1e-06
    %v490 = vadd.f32 %v478, 1e-06
    %v491 = vadd.f32 %v479, 1e-06
    %v492 = vadd.f32 %v480, 1e-06
    %v493 = vadd.f32 %v481, 1e-06
    %v494 = vadd.f32 %v482, 1e-06
    %v495 = vadd.f32 %v483, 1e-06
    %v496 = vadd.f32 %v484, 1e-06
    %v497 = vmul.f32 %v485, %v485
    %v498 = vmul.f32 %v486, %v486
    %v499 = vmul.f32 %v487, %v487
    %v500 = vmul.f32 %v488, %v488
    %v501 = vmul.f32 %v489, %v489
    %v502 = vmul.f32 %v490, %v490
    %v503 = vmul.f32 %v491, %v491
    %v504 = vmul.f32 %v492, %v492
    %v505 = vmul.f32 %v493, %v493
    %v506 = vmul.f32 %v494, %v494
    %v507 = vmul.f32 %v495, %v495
    %v508 = vmul.f32 %v496, %v496
    %v509 = vsel %vm30, %v497, 0.0
    %v510 = vsel %vm30, %v498, 0.0
    %v511 = vadd.f32 %v509, %v510
    %v512 = vsel %vm30, %v499, 0.0
    %v513 = vadd.f32 %v511, %v512
    %v514 = vsel %vm30, %v500, 0.0
    %v515 = vadd.f32 %v513, %v514
    %v516 = vrot.slane %v515, 4
    %v517 = vadd.f32 %v515, %v516
    %v518 = vrot.slane %v517, 2
    %v519 = vadd.f32 %v517, %v518
    %v520 = vrot.slane %v519, 1
    %v521 = vadd.f32 %v519, %v520
    %v522 = vsel %vm30, %v501, 0.0
    %v523 = vsel %vm30, %v502, 0.0
    %v524 = vadd.f32 %v522, %v523
    %v525 = vsel %vm30, %v503, 0.0
    %v526 = vadd.f32 %v524, %v525
    %v527 = vsel %vm30, %v504, 0.0
    %v528 = vadd.f32 %v526, %v527
    %v529 = vrot.slane %v528, 4
    %v530 = vadd.f32 %v528, %v529
    %v531 = vrot.slane %v530, 2
    %v532 = vadd.f32 %v530, %v531
    %v533 = vrot.slane %v532, 1
    %v534 = vadd.f32 %v532, %v533
    %v535 = vsel %vm30, %v505, 0.0
    %v536 = vsel %vm30, %v506, 0.0
    %v537 = vadd.f32 %v535, %v536
    %v538 = vsel %vm30, %v507, 0.0
    %v539 = vadd.f32 %v537, %v538
    %v540 = vsel %vm30, %v508, 0.0
    %v541 = vadd.f32 %v539, %v540
    %v542 = vrot.slane %v541, 4
    %v543 = vadd.f32 %v541, %v542
    %v544 = vrot.slane %v543, 2
    %v545 = vadd.f32 %v543, %v544
    %v546 = vrot.slane %v545, 1
    %v547 = vadd.f32 %v545, %v546
    %v548 = vrsqrt.pop %v521
    %v549 = vmul.f32 %v521, %v548
    %vm550 = vcmp.eq.f32.partialorder %v521, inf
    %v551 = vsel %vm550, %v521, %v549
    %vm552 = vcmp.eq.f32.partialorder %v521, 0.0
    %v553 = vand.u32 %v521, 2147483648
    %v554 = vsel %vm552, %v553, %v551
    %v555 = vrsqrt.pop %v534
    %v556 = vmul.f32 %v534, %v555
    %vm557 = vcmp.eq.f32.partialorder %v534, inf
    %v558 = vsel %vm557, %v534, %v556
    %vm559 = vcmp.eq.f32.partialorder %v534, 0.0
    %v560 = vand.u32 %v534, 2147483648
    %v561 = vsel %vm559, %v560, %v558
    %v562 = vrsqrt.pop %v547
    %v563 = vmul.f32 %v547, %v562
    %vm564 = vcmp.eq.f32.partialorder %v547, inf
    %v565 = vsel %vm564, %v547, %v563
    %vm566 = vcmp.eq.f32.partialorder %v547, 0.0
    %v567 = vand.u32 %v547, 2147483648
    %v568 = vsel %vm566, %v567, %v565
    %v569 = vsub.f32 %v437, %v461
    %v570 = vsub.f32 %v438, %v462
    %v571 = vsub.f32 %v439, %v463
    %v572 = vsub.f32 %v440, %v464
    %v573 = vsub.f32 %v441, %v465
    %v574 = vsub.f32 %v442, %v466
    %v575 = vsub.f32 %v443, %v467
    %v576 = vsub.f32 %v444, %v468
    %v577 = vsub.f32 %v445, %v469
    %v578 = vsub.f32 %v446, %v470
    %v579 = vsub.f32 %v447, %v471
    %v580 = vsub.f32 %v448, %v472
    %v581 = vadd.f32 %v569, 1e-06
    %v582 = vadd.f32 %v570, 1e-06
    %v583 = vadd.f32 %v571, 1e-06
    %v584 = vadd.f32 %v572, 1e-06
    %v585 = vadd.f32 %v573, 1e-06
    %v586 = vadd.f32 %v574, 1e-06
    %v587 = vadd.f32 %v575, 1e-06
    %v588 = vadd.f32 %v576, 1e-06
    %v589 = vadd.f32 %v577, 1e-06
    %v590 = vadd.f32 %v578, 1e-06
    %v591 = vadd.f32 %v579, 1e-06
    %v592 = vadd.f32 %v580, 1e-06
    %v593 = vmul.f32 %v581, %v581
    %v594 = vmul.f32 %v582, %v582
    %v595 = vmul.f32 %v583, %v583
    %v596 = vmul.f32 %v584, %v584
    %v597 = vmul.f32 %v585, %v585
    %v598 = vmul.f32 %v586, %v586
    %v599 = vmul.f32 %v587, %v587
    %v600 = vmul.f32 %v588, %v588
    %v601 = vmul.f32 %v589, %v589
    %v602 = vmul.f32 %v590, %v590
    %v603 = vmul.f32 %v591, %v591
    %v604 = vmul.f32 %v592, %v592
    %v605 = vsel %vm30, %v593, 0.0
    %v606 = vsel %vm30, %v594, 0.0
    %v607 = vadd.f32 %v605, %v606
    %v608 = vsel %vm30, %v595, 0.0
    %v609 = vadd.f32 %v607, %v608
    %v610 = vsel %vm30, %v596, 0.0
    %v611 = vadd.f32 %v609, %v610
    %v612 = vrot.slane %v611, 4
    %v613 = vadd.f32 %v611, %v612
    %v614 = vrot.slane %v613, 2
    %v615 = vadd.f32 %v613, %v614
    %v616 = vrot.slane %v615, 1
    %v617 = vadd.f32 %v615, %v616
    %v618 = vsel %vm30, %v597, 0.0
    %v619 = vsel %vm30, %v598, 0.0
    %v620 = vadd.f32 %v618, %v619
    %v621 = vsel %vm30, %v599, 0.0
    %v622 = vadd.f32 %v620, %v621
    %v623 = vsel %vm30, %v600, 0.0
    %v624 = vadd.f32 %v622, %v623
    %v625 = vrot.slane %v624, 4
    %v626 = vadd.f32 %v624, %v625
    %v627 = vrot.slane %v626, 2
    %v628 = vadd.f32 %v626, %v627
    %v629 = vrot.slane %v628, 1
    %v630 = vadd.f32 %v628, %v629
    %v631 = vsel %vm30, %v601, 0.0
    %v632 = vsel %vm30, %v602, 0.0
    %v633 = vadd.f32 %v631, %v632
    %v634 = vsel %vm30, %v603, 0.0
    %v635 = vadd.f32 %v633, %v634
    %v636 = vsel %vm30, %v604, 0.0
    %v637 = vadd.f32 %v635, %v636
    %v638 = vrot.slane %v637, 4
    %v639 = vadd.f32 %v637, %v638
    %v640 = vrot.slane %v639, 2
    %v641 = vadd.f32 %v639, %v640
    %v642 = vrot.slane %v641, 1
    %v643 = vadd.f32 %v641, %v642
    %v644 = vrsqrt.pop %v617
    %v645 = vmul.f32 %v617, %v644
    %vm646 = vcmp.eq.f32.partialorder %v617, inf
    %v647 = vsel %vm646, %v617, %v645
    %vm648 = vcmp.eq.f32.partialorder %v617, 0.0
    %v649 = vand.u32 %v617, 2147483648
    %v650 = vsel %vm648, %v649, %v647
    %v651 = vrsqrt.pop %v630
    %v652 = vmul.f32 %v630, %v651
    %vm653 = vcmp.eq.f32.partialorder %v630, inf
    %v654 = vsel %vm653, %v630, %v652
    %vm655 = vcmp.eq.f32.partialorder %v630, 0.0
    %v656 = vand.u32 %v630, 2147483648
    %v657 = vsel %vm655, %v656, %v654
    %v658 = vrsqrt.pop %v643
    %v659 = vmul.f32 %v643, %v658
    %vm660 = vcmp.eq.f32.partialorder %v643, inf
    %v661 = vsel %vm660, %v643, %v659
    %vm662 = vcmp.eq.f32.partialorder %v643, 0.0
    %v663 = vand.u32 %v643, 2147483648
    %v664 = vsel %vm662, %v663, %v661
    %v665 = vsub.f32 %v554, %v650
    %v666 = vsub.f32 %v561, %v657
    %v667 = vsub.f32 %v568, %v664
    %v668 = vadd.f32 %v665, 1.0
    %v669 = vadd.f32 %v666, 1.0
    %v670 = vadd.f32 %v667, 1.0
    %v671 = vmax.f32 %v668, 0.0
    %v672 = vmax.f32 %v669, 0.0
    %v673 = vmax.f32 %v670, 0.0
    %v677 = vsel %vm406, %v672, %v671
    %v678 = vsel %vm408, %v673, %v677
    %v680 = vsel %vm396, %v678, 0.0
    %vm681 = vcmask 59392
    %v682 = vsel %vm681, %v680, 0.0
    %683 = vadd.xlane.f32.xlu0 %v682
    %v684 = vpop.xlane.xlu0 %683
    %v685 = vrot.slane %v684, 4
    %v686 = vadd.f32 %v684, %v685
    %v687 = vrot.slane %v686, 2
    %v688 = vadd.f32 %v686, %v687
    %v689 = vrot.slane %v688, 1
    %v690 = vadd.f32 %v688, %v689
    %s691 = vtos %v690
    %s692 = smul.f32 %s436, 0.013888889
    %s693 = smul.f32 %s691, 1.25
    %s694 = sadd.f32 %s692, %s693
    %v695 = vstv %s694
    %696 = vst [vmem:[#allocation2] sm:$0xff] %v695
    // Predicated region
    $region14: #{tpu_custom_call.1} parent=1 // pred_check
      _
    $region15: #{tpu_custom_call.1} parent=1 // pred_check_branch
      %698 = sbr.rel (0) target = $region17
    $region16: #{tpu_custom_call.1} parent=1 // pred_region
      %s700 = ssub.s32 128, 128
      %701 = vsyncadd [#allocation3], %s700
      %s703 = sshll.u32 [#allocation2], 4
      %s704 = int_to_ptr.vmem [resolvable:$true] %s703
      %706 = dma.vmem_to_hbm [thread:$0]  %s704, 128, %s3, [#allocation3]
    $region17: #{tpu_custom_call.1} parent=1 // pred_fallthru
      _
    // Predicated region
    $region18: #{tpu_custom_call.1} parent=1 // pred_check
      _
    $region19: #{tpu_custom_call.1} parent=1 // pred_check_branch
      %708 = sbr.rel (0) target = $region21
    $region20: #{tpu_custom_call.1} parent=1 // pred_region
      %709 = dma.done [#allocation3], 128
    $region21: #{tpu_custom_call.1} parent=1 // pred_fallthru
      _
    %710 = vsyncpa [#allocation3], 1

</llo_original>
